<compile_context>
chip_gen: v7x
topology: tpu7x:2x2x1
jax: 0.10.0
libtpu: 0.0.40
codegen_flags: <defaults>
</compile_context>

<pallas_src>
import functools

import jax
import jax.numpy as jnp
from jax.experimental import pallas as pl
from jax.experimental.pallas import tpu as pltpu

ALIGNSIZE = 8
REDDIM = 32
DOWNSAMPLE = 4
BN_EPS = 1e-5


def _round_up(x, m):
    return (x + m - 1) // m * m


def _vmem_limit_bytes():
    # ~75% of physical VMEM (v7x only has 64 MiB / TC); 48 MiB fallback is
    # safe on v5e/v6e (128 MiB) and v7x (64 MiB).
    try:
        cap = int(pltpu.get_tpu_info().vmem_capacity_bytes)
        return max(32 << 20, min((cap * 3) // 4, 96 << 20))
    except Exception:
        return 48 << 20


_VMEM_LIMIT = _vmem_limit_bytes()


# ----------------------------------------------------------------------------
# Pallas kernels
# ----------------------------------------------------------------------------
def _matmul_bias_kernel(x_ref, w_ref, b_ref, o_ref, *, relu):
    # o = relu(x @ w + b)   (1x1 convolution over flattened spatial positions)
    y = jnp.dot(x_ref[...], w_ref[...], preferred_element_type=jnp.float32)
    y = y + b_ref[...]
    if relu:
        y = jnp.maximum(y, 0.0)
    o_ref[...] = y


def pallas_matmul_bias(x, w, b, relu=False, block_m=256):
    """x: (M, K) f32/bf16, w: (K, N) bf16, b: (N,) f32 -> (M, N) f32.

    Tiled over M only (K, N are small for every call site); M axis is
    'parallel' so v7x splits rows across its two TensorCores.
    """
    M, K = x.shape
    K2, N = w.shape
    assert K == K2
    Mp = _round_up(M, 8)
    tm = min(block_m, Mp)
    Mp = _round_up(Mp, tm)
    if Mp != M:
        x = jnp.pad(x, ((0, Mp - M), (0, 0)))
    x = x.astype(jnp.bfloat16)          # halve activation DMA traffic
    w = w.astype(jnp.bfloat16)
    b2 = b.reshape(1, N).astype(jnp.float32)

    flops = 2 * Mp * K * N
    bytes_accessed = Mp * K * 2 + K * N * 2 + Mp * N * 4 + N * 4

    out = pl.pallas_call(
        functools.partial(_matmul_bias_kernel, relu=relu),
        out_shape=jax.ShapeDtypeStruct((Mp, N), jnp.float32),
        grid=(Mp // tm,),
        in_specs=[
            pl.BlockSpec((tm, K), lambda i: (i, 0)),
            pl.BlockSpec((K, N), lambda i: (0, 0)),
            pl.BlockSpec((1, N), lambda i: (0, 0)),
        ],
        out_specs=pl.BlockSpec((tm, N), lambda i: (i, 0)),
        compiler_params=pltpu.CompilerParams(
            dimension_semantics=("parallel",),
            vmem_limit_bytes=_VMEM_LIMIT),
        cost_estimate=pl.CostEstimate(
            flops=flops, transcendentals=0, bytes_accessed=bytes_accessed),
    )(x, w, b2)
    return out[:M] if Mp != M else out


def _fc_head_kernel(x_ref, w1_ref, b1_ref, w2_ref, b2_ref, w3_ref, b3_ref,
                    o_ref, acc_ref):
    # conv1 (8x8 kernel, valid -> 1x1 spatial) expressed as a K-tiled matmul
    # accumulated in f32 VMEM scratch. BatchNorm is pre-folded into w/b.
    k = pl.program_id(0)

    @pl.when(k == 0)
    def _():
        acc_ref[...] = jnp.zeros_like(acc_ref)

    acc_ref[...] += jnp.dot(x_ref[...], w1_ref[...],
                            preferred_element_type=jnp.float32)

    @pl.when(k == pl.num_programs(0) - 1)
    def _():
        h1 = jnp.maximum(acc_ref[...] + b1_ref[...], 0.0)          # (BN1 folded) + ReLU
        h2 = jnp.dot(h1.astype(w2_ref.dtype), w2_ref[...],
                     preferred_element_type=jnp.float32) + b2_ref[...]
        h2 = jnp.maximum(h2, 0.0)                                  # (BN2 folded) + ReLU
        # Dropout(p=0.5) is identity in eval mode.
        o_ref[...] = jnp.dot(h2.astype(w3_ref.dtype), w3_ref[...],
                             preferred_element_type=jnp.float32) + b3_ref[...]


def pallas_fc_head(x, p, block_k=512):
    """x: (N, reddim*2*alignsize*alignsize) -> (N, 1).

    The (4096, 768) weight dominates HBM traffic; it is streamed in bf16
    K-tiles (reduction grid axis, 'arbitrary') so DMA overlaps with compute.
    """
    M, K = x.shape
    Mp = _round_up(M, 8)
    if Mp != M:
        x = jnp.pad(x, ((0, Mp - M), (0, 0)))
    x = x.astype(jnp.bfloat16)

    w1, w2, w3 = p["fc_w1"], p["fc_w2"], p["fc_w3"]
    b1 = p["fc_b1"].reshape(1, -1)
    b2 = p["fc_b2"].reshape(1, -1)
    b3 = p["fc_b3"].reshape(1, -1)
    H1, H2 = w1.shape[1], w2.shape[1]

    tk = min(block_k, K)
    assert K % tk == 0, "reduction dim must be a multiple of the K tile"

    flops = 2 * Mp * (K * H1 + H1 * H2 + H2)
    bytes_accessed = (Mp * K * 2 + K * H1 * 2 + H1 * H2 * 2 + H2 * 2
                      + (H1 + H2 + 1) * 4 + Mp * 4)

    out = pl.pallas_call(
        _fc_head_kernel,
        out_shape=jax.ShapeDtypeStruct((Mp, 1), jnp.float32),
        grid_spec=pltpu.PrefetchScalarGridSpec(
            num_scalar_prefetch=0,
            grid=(K // tk,),
            in_specs=[
                pl.BlockSpec((Mp, tk), lambda k: (0, k)),
                pl.BlockSpec((tk, H1), lambda k: (k, 0)),
                pl.BlockSpec((1, H1), lambda k: (0, 0)),
                pl.BlockSpec((H1, H2), lambda k: (0, 0)),
                pl.BlockSpec((1, H2), lambda k: (0, 0)),
                pl.BlockSpec((H2, 1), lambda k: (0, 0)),
                pl.BlockSpec((1, 1), lambda k: (0, 0)),
            ],
            out_specs=pl.BlockSpec((Mp, 1), lambda k: (0, 0)),
            scratch_shapes=[pltpu.VMEM((Mp, H1), jnp.float32)]),
        compiler_params=pltpu.CompilerParams(
            dimension_semantics=("arbitrary",),
            vmem_limit_bytes=_VMEM_LIMIT),
        cost_estimate=pl.CostEstimate(
            flops=flops, transcendentals=0, bytes_accessed=bytes_accessed),
    )(x, w1, b1, w2, b2, w3, b3)
    return out[:M]


# ----------------------------------------------------------------------------
# Plain-JAX glue (resize / RoI sampling / reshapes)
# ----------------------------------------------------------------------------
def avg_pool(x, k):
    # x: (B, H, W, C)
    B, H, W, C = x.shape
    return x.reshape(B, H // k, k, W // k, k, C).mean(axis=(2, 4))


def pointwise_conv(x, w, b, relu=False):
    # 1x1 conv via the Pallas matmul kernel. x: (B, H, W, Cin), w: (Cin, Cout)
    B, H, W, C = x.shape
    y = pallas_matmul_bias(x.reshape(B * H * W, C), w, b, relu=relu)
    return y.reshape(B, H, W, -1)


def _hat_weights(coords, size):
    # Bilinear interpolation weights (triangular hat) for edge-clamped coords.
    # coords: (..., P) float -> (..., P, size)
    c = jnp.clip(coords, 0.0, size - 1.0)
    grid = jnp.arange(size, dtype=jnp.float32)
    return jnp.maximum(0.0, 1.0 - jnp.abs(c[..., None] - grid))


def bilinear_resize_align_corners(x, out_h, out_w):
    # nn.UpsamplingBilinear2d == bilinear interpolation with align_corners=True,
    # expressed as two small interpolation matmuls (MXU-friendly, no gathers).
    B, H, W, C = x.shape

    def interp_matrix(in_size, out_size):
        if out_size == 1:
            src = jnp.zeros((1,), jnp.float32)
        else:
            src = jnp.arange(out_size, dtype=jnp.float32) * (in_size - 1) / (out_size - 1)
        return _hat_weights(src, in_size)

    Wy = interp_matrix(H, out_h)
    Wx = interp_matrix(W, out_w)
    return jnp.einsum("oh,bhwc,pw->bopc", Wy, x, Wx)


def roi_align_avg(feat, boxes, align, spatial_scale):
    # TODO(synk): exact GAIC RoIAlignAvg CUDA semantics approximated with an
    # (align x align) bilinear grid sampled over the scaled box.
    # Separable formulation: per-box (align,H) and (align,W) interpolation
    # matrices applied as einsums (MXU) instead of gather-based sampling.
    B, H, W, C = feat.shape
    bidx = boxes[:, 0].astype(jnp.int32)
    x1 = boxes[:, 1] * spatial_scale
    y1 = boxes[:, 2] * spatial_scale
    x2 = boxes[:, 3] * spatial_scale
    y2 = boxes[:, 4] * spatial_scale
    roi_w = jnp.maximum(x2 - x1, 0.0)
    roi_h = jnp.maximum(y2 - y1, 0.0)

    p = jnp.arange(align, dtype=jnp.float32) / (align - 1.0)
    ys = y1[:, None] + p[None, :] * roi_h[:, None]                 # (N, align)
    xs = x1[:, None] + p[None, :] * roi_w[:, None]                 # (N, align)

    wy = _hat_weights(ys, H) * ((ys >= 0) & (ys < H)).astype(jnp.float32)[..., None]
    wx = _hat_weights(xs, W) * ((xs >= 0) & (xs < W)).astype(jnp.float32)[..., None]

    fmap = feat[bidx]                                              # (N, H, W, C)
    return jnp.einsum("nph,nhwc,nqw->npqc", wy, fmap, wx)


def rod_align_avg(feat, boxes, align, spatial_scale):
    # TODO(synk): exact GAIC RoDAlignAvg CUDA semantics approximated: sample an
    # (align x align) grid over the whole feature map, zeroing samples inside
    # the RoI. The box-independent grid is sampled once per image; only the
    # per-box mask is applied afterwards.
    B, H, W, C = feat.shape
    gy = jnp.arange(align, dtype=jnp.float32) * (H - 1.0) / (align - 1.0)
    gx = jnp.arange(align, dtype=jnp.float32) * (W - 1.0) / (align - 1.0)
    Gy = _hat_weights(gy, H)
    Gx = _hat_weights(gx, W)
    grid_feat = jnp.einsum("ph,bhwc,qw->bpqc", Gy, feat, Gx)       # (B, a, a, C)

    bidx = boxes[:, 0].astype(jnp.int32)
    x1 = boxes[:, 1] * spatial_scale
    y1 = boxes[:, 2] * spatial_scale
    x2 = boxes[:, 3] * spatial_scale
    y2 = boxes[:, 4] * spatial_scale
    inside = ((gy[None, :, None] >= y1[:, None, None])
              & (gy[None, :, None] <= y2[:, None, None])
              & (gx[None, None, :] >= x1[:, None, None])
              & (gx[None, None, :] <= x2[:, None, None]))          # (N, a, a)
    return jnp.where(inside[..., None], 0.0, grid_feat[bidx])


# ----------------------------------------------------------------------------
# Parameters (deterministic, xavier-uniform like the module's weights_init;
# BatchNorm folded into the conv weights, MXU weights pre-cast to bf16)
# ----------------------------------------------------------------------------
def xavier_uniform(key, shape_pt):
    # shape_pt = (out_c, in_c, kh, kw); PyTorch xavier_uniform_ on conv weight.
    fan_out = shape_pt[0] * shape_pt[2] * shape_pt[3]
    fan_in = shape_pt[1] * shape_pt[2] * shape_pt[3]
    bound = (6.0 / (fan_in + fan_out)) ** 0.5
    return jax.random.uniform(key, shape_pt, jnp.float32, -bound, bound)


def init_params(key):
    ks = jax.random.split(key, 8)
    # Eval-mode BN with gamma=1, beta=0, running_mean=0, running_var=1:
    bn_scale = 1.0 / jnp.sqrt(1.0 + BN_EPS)
    bn_shift = 0.0

    # stand-in backbone pointwise convs (mobilenetv2 channel counts 32/96/320)
    f3_w = 0.2 * jax.random.normal(ks[0], (3, 32), jnp.float32)
    f4_w = 0.2 * jax.random.normal(ks[1], (32, 96), jnp.float32)
    f5_w = 0.2 * jax.random.normal(ks[2], (96, 320), jnp.float32)

    # DimRed: Conv2d(448, reddim, 1)
    dimred_pt = xavier_uniform(ks[3], (REDDIM, 448, 1, 1))
    # FC layers: Conv2d(reddim*2, 768, 8), Conv2d(768, 128, 1), Conv2d(128, 1, 1)
    w1_pt = xavier_uniform(ks[4], (768, REDDIM * 2, ALIGNSIZE, ALIGNSIZE))
    w2_pt = xavier_uniform(ks[5], (128, 768, 1, 1))
    w3_pt = xavier_uniform(ks[6], (1, 128, 1, 1))

    # (in, out) layouts for the matmul kernels.
    fc_w1 = w1_pt.reshape(768, -1).T           # (reddim*2*8*8, 768)
    fc_w2 = w2_pt.reshape(128, 768).T          # (768, 128)
    fc_w3 = w3_pt.reshape(1, 128).T            # (128, 1)
    fc_b1 = jnp.zeros((768,), jnp.float32)
    fc_b2 = jnp.zeros((128,), jnp.float32)

    # Fold BN1/BN2 (affine in eval mode) into the preceding conv weight/bias.
    fc_w1_f = fc_w1 * bn_scale
    fc_b1_f = fc_b1 * bn_scale + bn_shift
    fc_w2_f = fc_w2 * bn_scale
    fc_b2_f = fc_b2 * bn_scale + bn_shift

    bf16 = jnp.bfloat16
    return dict(
        f3_w=f3_w.astype(bf16), f3_b=jnp.zeros((32,), jnp.float32),
        f4_w=f4_w.astype(bf16), f4_b=jnp.zeros((96,), jnp.float32),
        f5_w=f5_w.astype(bf16), f5_b=jnp.zeros((320,), jnp.float32),
        dimred_w=dimred_pt.reshape(REDDIM, 448).T.astype(bf16),
        dimred_b=jnp.zeros((REDDIM,), jnp.float32),
        fc_w1=fc_w1_f.astype(bf16), fc_b1=fc_b1_f,
        fc_w2=fc_w2_f.astype(bf16), fc_b2=fc_b2_f,
        fc_w3=fc_w3.astype(bf16), fc_b3=jnp.zeros((1,), jnp.float32),
    )


# ----------------------------------------------------------------------------
# Forward pass (mirrors crop_model_multi_scale_shared.forward)
# ----------------------------------------------------------------------------
def crop_model_forward(params, im_data, boxes):
    # im_data: (B, 3, H, W) NCHW (PyTorch convention); boxes: (N, 5) [b, x1, y1, x2, y2]
    x = jnp.transpose(im_data, (0, 2, 3, 1)).astype(jnp.float32)   # -> NHWC

    # TODO(synk): mobilenetv2 backbone is external (not provided); replaced with
    # a deterministic stand-in extractor producing the correct channels/strides
    # (f3: 32ch @ /8, f4: 96ch @ /16, f5: 320ch @ /32). ReLU is fused into the
    # Pallas matmul kernel (no extra HBM round trip).
    f3 = pointwise_conv(avg_pool(x, 8), params["f3_w"], params["f3_b"], relu=True)
    f4 = pointwise_conv(avg_pool(f3, 2), params["f4_w"], params["f4_b"], relu=True)
    f5 = pointwise_conv(avg_pool(f4, 2), params["f5_w"], params["f5_b"], relu=True)

    h4, w4 = f4.shape[1], f4.shape[2]
    f3_d = bilinear_resize_align_corners(f3, h4, w4)        # downsample2 (x0.5)
    f5_u = bilinear_resize_align_corners(f5, h4, w4)        # upsample2   (x2.0)
    cat_feat = jnp.concatenate([f3_d, f4, 0.5 * f5_u], axis=-1)   # (B, h4, w4, 448)

    # DimRed: 1x1 conv 448 -> reddim (Pallas matmul kernel, M-tiled / parallel)
    B, Hc, Wc, Cc = cat_feat.shape
    red = pallas_matmul_bias(cat_feat.reshape(B * Hc * Wc, Cc),
                             params["dimred_w"], params["dimred_b"])
    red_feat = red.reshape(B, Hc, Wc, REDDIM)

    # RoIAlign / RoDAlign (avg), spatial_scale = 1 / 2**downsample
    scale = 1.0 / (2 ** DOWNSAMPLE)
    roi_feat = roi_align_avg(red_feat, boxes, ALIGNSIZE, scale)   # (N, 8, 8, reddim)
    rod_feat = rod_align_avg(red_feat, boxes, ALIGNSIZE, scale)   # (N, 8, 8, reddim)
    final_feat = jnp.concatenate([roi_feat, rod_feat], axis=-1)   # (N, 8, 8, 2*reddim)

    # FC head: flatten in PyTorch (C, kh, kw) order to match conv-weight layout.
    Nb = final_feat.shape[0]
    fc_in = jnp.transpose(final_feat, (0, 3, 1, 2)).reshape(Nb, -1)   # (N, 4096)
    pred = pallas_fc_head(fc_in, params)                              # (N, 1)
    return pred.reshape(Nb, 1, 1, 1)   # matches Conv2d(128, 1, 1) output on 1x1 maps


# ----------------------------------------------------------------------------
if __name__ == "__main__":
    key = jax.random.PRNGKey(0)
    k_im, k_par = jax.random.split(key)

    B, H, W = 2, 64, 64
    im_data = jax.random.normal(k_im, (B, 3, H, W), jnp.float32)   # NCHW like PyTorch
    boxes = jnp.array(
        [[0.0, 4.0, 4.0, 56.0, 56.0],
         [0.0, 0.0, 0.0, 63.0, 63.0],
         [0.0, 8.0, 16.0, 40.0, 48.0],
         [1.0, 16.0, 8.0, 60.0, 50.0],
         [1.0, 0.0, 0.0, 32.0, 32.0],
         [1.0, 10.0, 10.0, 50.0, 60.0]],
        dtype=jnp.float32,
    )

    params = init_params(k_par)
    prediction = crop_model_forward(params, im_data, boxes)
    prediction = jax.block_until_ready(prediction)

    assert prediction.shape == (boxes.shape[0], 1, 1, 1)
    assert bool(jnp.all(jnp.isfinite(prediction)))
    print("KERNEL_OK")
</pallas_src>

<mosaic_0001>
module attributes {stable_mosaic.version = 11 : i64} {
  func.func @_matmul_bias_kernel(%arg0: i32, %arg1: memref<128x3xbf16, #tpu.memory_space<vmem>>, %arg2: memref<3x32xbf16, #tpu.memory_space<vmem>>, %arg3: memref<1x32xf32, #tpu.memory_space<vmem>>, %arg4: memref<128x32xf32, #tpu.memory_space<vmem>>) attributes {dimension_semantics = [#tpu.dimension_semantics<parallel>], iteration_bounds = array<i64: 1>, scalar_prefetch = 0 : i64, scratch_operands = 0 : i64, tpu.core_type = #tpu.core_type<tc>, window_params = [{transform_indices = @transform_0, window_bounds = array<i64: 128, 3>}, {pipeline_mode = #tpu.pipeline_mode<synchronous>, transform_indices = @transform_1, window_bounds = array<i64: 3, 32>}, {pipeline_mode = #tpu.pipeline_mode<synchronous>, transform_indices = @transform_2, window_bounds = array<i64: 1, 32>}, {transform_indices = @transform_3, window_bounds = array<i64: 128, 32>}]} {
    %c0 = arith.constant 0 : index
    %c0_0 = arith.constant 0 : index
    %0 = vector.load %arg1[%c0, %c0_0] : memref<128x3xbf16, #tpu.memory_space<vmem>>, vector<128x3xbf16>
    %c0_1 = arith.constant 0 : index
    %c0_2 = arith.constant 0 : index
    %1 = vector.load %arg2[%c0_1, %c0_2] : memref<3x32xbf16, #tpu.memory_space<vmem>>, vector<3x32xbf16>
    %cst = arith.constant dense<0.000000e+00> : vector<128x32xf32>
    %2 = tpu.matmul %0, %1, %cst {dimension_numbers = #tpu.dot_dimension_numbers<[1], [0], [0], [1], [0, 0, 1, 1], [], []>} : vector<128x3xbf16>, vector<3x32xbf16>, vector<128x32xf32> -> vector<128x32xf32>
    %c0_3 = arith.constant 0 : index
    %c0_4 = arith.constant 0 : index
    %3 = vector.load %arg3[%c0_3, %c0_4] : memref<1x32xf32, #tpu.memory_space<vmem>>, vector<1x32xf32>
    %4 = vector.broadcast %3 : vector<1x32xf32> to vector<128x32xf32>
    %5 = arith.addf %2, %4 : vector<128x32xf32>
    %cst_5 = arith.constant 0.000000e+00 : f32
    %6 = vector.broadcast %cst_5 : f32 to vector<128x32xf32>
    %7 = arith.maximumf %5, %6 : vector<128x32xf32>
    %c0_6 = arith.constant 0 : index
    %c0_7 = arith.constant 0 : index
    %8 = vector.load %arg4[%c0_6, %c0_7] : memref<128x32xf32, #tpu.memory_space<vmem>>, vector<128x32xf32>
    tpu.vector_store %arg4[%c0_6, %c0_7], %7 {strides = array<i32>} : memref<128x32xf32, #tpu.memory_space<vmem>>, vector<128x32xf32>,
    return
  }
  func.func @transform_0(%arg0: i32) -> (i32, i32) {
    %c0_i32 = arith.constant 0 : i32
    %c0_i32_0 = arith.constant 0 : i32
    return %arg0, %c0_i32 : i32, i32
  }
  func.func @transform_1(%arg0: i32) -> (i32, i32) {
    %c0_i32 = arith.constant 0 : i32
    %c0_i32_0 = arith.constant 0 : i32
    %c0_i32_1 = arith.constant 0 : i32
    return %c0_i32, %c0_i32_0 : i32, i32
  }
  func.func @transform_2(%arg0: i32) -> (i32, i32) {
    %c0_i32 = arith.constant 0 : i32
    %c0_i32_0 = arith.constant 0 : i32
    %c0_i32_1 = arith.constant 0 : i32
    return %c0_i32, %c0_i32_0 : i32, i32
  }
  func.func @transform_3(%arg0: i32) -> (i32, i32) {
    %c0_i32 = arith.constant 0 : i32
    %c0_i32_0 = arith.constant 0 : i32
    return %arg0, %c0_i32 : i32, i32
  }
}

</mosaic_0001>

<llo_original>
// kernel: tpu_custom_call.1
$region0: #{tpu_custom_call.1}
  #allocation0 [shape = 'u32[]', space=smem, size = 0x4, offset = 0x4, fixed_abs, tag = 'smem constant byte address 0x4 - core index']
  #allocation1 [shape = 'u32[144,128]{1,0:T(1,128)}', space=vmem, size = 0x12000, scoped, tag = 'internal scratch']
  %s0 = inlined_call_operand.vmem [shape: bf16[128,3], index: 0, kind: input, shape index: {}]
  %s1 = inlined_call_operand.vmem [shape: bf16[3,32], index: 1, kind: input, shape index: {}]
  %s2 = inlined_call_operand.vmem [shape: f32[1,32], index: 2, kind: input, shape index: {}]
  %s3 = inlined_call_operand.vmem [shape: f32[128,32], index: 3, kind: output, shape index: {}]
  %s4 = sld [smem:[#allocation0]]
  $region22: #{tpu_custom_call.1} parent=0
    _
  %s6 = ssub.s32 1, %s4
  %s7 = scalar_select 0, %s6, %s4
  // Predicated region
  $region2: #{tpu_custom_call.1} parent=0 // pred_check
    _
  $region3: #{tpu_custom_call.1} parent=0 // pred_check_branch
    %9 = sbr.rel (0) target = $region5
  $region4: #{tpu_custom_call.1} parent=0 // pred_region
    _
  $region5: #{tpu_custom_call.1} parent=0 // pred_fallthru
    _
  // Predicated region
  $region6: #{tpu_custom_call.1} parent=0 // pred_check
    _
  $region7: #{tpu_custom_call.1} parent=0 // pred_check_branch
    %11 = sbr.rel (0) target = $region9
  $region8: #{tpu_custom_call.1} parent=0 // pred_region
    _
  $region9: #{tpu_custom_call.1} parent=0 // pred_fallthru
    _
  // Predicated region
  $region10: #{tpu_custom_call.1} parent=0 // pred_check
    _
  $region11: #{tpu_custom_call.1} parent=0 // pred_check_branch
    %13 = sbr.rel (0) target = $region13
  $region12: #{tpu_custom_call.1} parent=0 // pred_region
    _
  $region13: #{tpu_custom_call.1} parent=0 // pred_fallthru
    _
  %v15 = vld [vmem:[%s0] sm:$0xf]
  %v16 = vld [vmem:[%s0 + $0x4] sm:$0xf]
  %v17 = vld [vmem:[%s0 + $0x8] sm:$0xf]
  %v18 = vld [vmem:[%s0 + $0xc] sm:$0xf]
  %v19 = vld [vmem:[%s0 + $0x10] sm:$0xf]
  %v20 = vld [vmem:[%s0 + $0x14] sm:$0xf]
  %v21 = vld [vmem:[%s0 + $0x18] sm:$0xf]
  %v22 = vld [vmem:[%s0 + $0x1c] sm:$0xf]
  %v23 = vld [vmem:[%s0 + $0x20] sm:$0xf]
  %v24 = vld [vmem:[%s0 + $0x24] sm:$0xf]
  %v25 = vld [vmem:[%s0 + $0x28] sm:$0xf]
  %v26 = vld [vmem:[%s0 + $0x2c] sm:$0xf]
  %v27 = vld [vmem:[%s0 + $0x30] sm:$0xf]
  %v28 = vld [vmem:[%s0 + $0x34] sm:$0xf]
  %v29 = vld [vmem:[%s0 + $0x38] sm:$0xf]
  %v30 = vld [vmem:[%s0 + $0x3c] sm:$0xf]
  %v31 = vld [vmem:[%s1] sm:$0x3]
  %v32 = vld [vmem:[%s2] sm:$0x1]
  %v34 = vlaneseq
  %v35 = vshrl.u32 %v34, 7
  %v36 = vsub.s32 0, %v35
  %v37 = vrot.slane %v32, %v36
  %v55 = vunpack.c.l.b16 %v15
  %v56 = vunpack.c.l.b16 %v16
  %v57 = vunpack.c.l.b16 %v17
  %v58 = vunpack.c.l.b16 %v18
  %v59 = vunpack.c.l.b16 %v19
  %v60 = vunpack.c.l.b16 %v20
  %v61 = vunpack.c.l.b16 %v21
  %v62 = vunpack.c.l.b16 %v22
  %v63 = vunpack.c.l.b16 %v23
  %v64 = vunpack.c.l.b16 %v24
  %v65 = vunpack.c.l.b16 %v25
  %v66 = vunpack.c.l.b16 %v26
  %v67 = vunpack.c.l.b16 %v27
  %v68 = vunpack.c.l.b16 %v28
  %v69 = vunpack.c.l.b16 %v29
  %v70 = vunpack.c.l.b16 %v30
  %v71 = vpack.c.b16 %v56, %v55
  %v72 = vpack.c.b16 %v58, %v57
  %v73 = vpack.c.b16 %v60, %v59
  %v74 = vpack.c.b16 %v62, %v61
  %v75 = vpack.c.b16 %v64, %v63
  %v76 = vpack.c.b16 %v66, %v65
  %v77 = vpack.c.b16 %v68, %v67
  %v78 = vpack.c.b16 %v70, %v69
  %vm79 = vcmask 23552
  %v81 = vsel %vm79, %v71, 0
  %v84 = vsel %vm79, %v72, 0
  %v87 = vsel %vm79, %v73, 0
  %v90 = vsel %vm79, %v74, 0
  %v93 = vsel %vm79, %v75, 0
  %v96 = vsel %vm79, %v76, 0
  %v99 = vsel %vm79, %v77, 0
  %v102 = vsel %vm79, %v78, 0
  %vm104 = vcmask 1040384
  %vm105 = vcmask 1041408
  %v106 = vsel %vm104, 4294967295, 65535
  %v107 = vsel %vm105, %v106, 0
  %v109 = vand.u32 %v31, %v107
  %111 = vmatprep.subr.bf16.mxu0 0
  %112 = vmatpush1.bf16.msra.mxu0 %v109
  %113 = vmatprep.subr.bf16.mxu0 0
  %114 = vmatpush1.bf16.msra.mxu0 0
  %115 = vmatprep.subr.bf16.mxu0 0
  %116 = vmatpush1.bf16.msra.mxu0 0
  %117 = vmatprep.subr.bf16.mxu0 0
  %118 = vmatpush1.bf16.msra.mxu0 0
  %119 = vmatprep.subr.bf16.mxu0 0
  %120 = vmatpush1.bf16.msra.mxu0 0
  %121 = vmatprep.subr.bf16.mxu0 0
  %122 = vmatpush1.bf16.msra.mxu0 0
  %123 = vmatprep.subr.bf16.mxu0 0
  %124 = vmatpush1.bf16.msra.mxu0 0
  %125 = vmatprep.subr.bf16.mxu0 0
  %126 = vmatpush1.bf16.msra.mxu0 0
  %127 = vmatprep.subr.bf16.mxu0 0
  %128 = vmatpush1.bf16.msra.mxu0 0
  %129 = vmatprep.subr.bf16.mxu0 0
  %130 = vmatpush1.bf16.msra.mxu0 0
  %131 = vmatprep.subr.bf16.mxu0 0
  %132 = vmatpush1.bf16.msra.mxu0 0
  %133 = vmatprep.subr.bf16.mxu0 0
  %134 = vmatpush1.bf16.msra.mxu0 0
  %135 = vmatprep.subr.bf16.mxu0 0
  %136 = vmatpush1.bf16.msra.mxu0 0
  %137 = vmatprep.subr.bf16.mxu0 0
  %138 = vmatpush1.bf16.msra.mxu0 0
  %139 = vmatprep.subr.bf16.mxu0 0
  %140 = vmatpush1.bf16.msra.mxu0 0
  %141 = vmatprep.subr.bf16.mxu0 0
  %142 = vmatpush1.bf16.msra.mxu0 0
  %143 = vmatprep.mubr.bf16.mxu0 0
  %144 = vmatmul.mubr.bf16.gmra.mrb[0].mxu0 %v81
  %v145 = vpop.f32.mrb[0].mxu0
  %v146 = vadd.f32 %v37, %v145
  %v147 = vpop.f32.mrb[0].mxu0
  %v148 = vpop.f32.mrb[0].mxu0
  %v149 = vadd.f32 %v37, %v148
  %v150 = vpop.f32.mrb[0].mxu0
  %151 = vmatprep.mubr.bf16.mxu0 0
  %152 = vmatmul.mubr.bf16.gmra.mrb[0].mxu0 %v84
  %v153 = vpop.f32.mrb[0].mxu0
  %v154 = vadd.f32 %v37, %v153
  %v155 = vpop.f32.mrb[0].mxu0
  %v156 = vpop.f32.mrb[0].mxu0
  %v157 = vadd.f32 %v37, %v156
  %v158 = vpop.f32.mrb[0].mxu0
  %159 = vmatprep.mubr.bf16.mxu0 0
  %160 = vmatmul.mubr.bf16.gmra.mrb[0].mxu0 %v87
  %v161 = vpop.f32.mrb[0].mxu0
  %v162 = vadd.f32 %v37, %v161
  %v163 = vpop.f32.mrb[0].mxu0
  %v164 = vpop.f32.mrb[0].mxu0
  %v165 = vadd.f32 %v37, %v164
  %v166 = vpop.f32.mrb[0].mxu0
  %167 = vmatprep.mubr.bf16.mxu0 0
  %168 = vmatmul.mubr.bf16.gmra.mrb[0].mxu0 %v90
  %v169 = vpop.f32.mrb[0].mxu0
  %v170 = vadd.f32 %v37, %v169
  %v171 = vpop.f32.mrb[0].mxu0
  %v172 = vpop.f32.mrb[0].mxu0
  %v173 = vadd.f32 %v37, %v172
  %v174 = vpop.f32.mrb[0].mxu0
  %175 = vmatprep.mubr.bf16.mxu0 0
  %176 = vmatmul.mubr.bf16.gmra.mrb[0].mxu0 %v93
  %v177 = vpop.f32.mrb[0].mxu0
  %v178 = vadd.f32 %v37, %v177
  %v179 = vpop.f32.mrb[0].mxu0
  %v180 = vpop.f32.mrb[0].mxu0
  %v181 = vadd.f32 %v37, %v180
  %v182 = vpop.f32.mrb[0].mxu0
  %183 = vmatprep.mubr.bf16.mxu0 0
  %184 = vmatmul.mubr.bf16.gmra.mrb[0].mxu0 %v96
  %v185 = vpop.f32.mrb[0].mxu0
  %v186 = vadd.f32 %v37, %v185
  %v187 = vpop.f32.mrb[0].mxu0
  %v188 = vpop.f32.mrb[0].mxu0
  %v189 = vadd.f32 %v37, %v188
  %v190 = vpop.f32.mrb[0].mxu0
  %191 = vmatprep.mubr.bf16.mxu0 0
  %192 = vmatmul.mubr.bf16.gmra.mrb[0].mxu0 %v99
  %v193 = vpop.f32.mrb[0].mxu0
  %v194 = vadd.f32 %v37, %v193
  %v195 = vpop.f32.mrb[0].mxu0
  %v196 = vpop.f32.mrb[0].mxu0
  %v197 = vadd.f32 %v37, %v196
  %v198 = vpop.f32.mrb[0].mxu0
  %199 = vmatprep.mubr.bf16.mxu0 0
  %200 = vmatmul.mubr.bf16.gmra.mrb[0].mxu0 %v102
  %v201 = vpop.f32.mrb[0].mxu0
  %v202 = vadd.f32 %v37, %v201
  %v203 = vpop.f32.mrb[0].mxu0
  %v204 = vpop.f32.mrb[0].mxu0
  %v205 = vadd.f32 %v37, %v204
  %v206 = vpop.f32.mrb[0].mxu0
  %207 = vdwg.mxu0
  %v208 = vmax.f32 %v146, 0.0
  %v209 = vmax.f32 %v149, 0.0
  %v210 = vmax.f32 %v154, 0.0
  %v211 = vmax.f32 %v157, 0.0
  %v212 = vmax.f32 %v162, 0.0
  %v213 = vmax.f32 %v165, 0.0
  %v214 = vmax.f32 %v170, 0.0
  %v215 = vmax.f32 %v173, 0.0
  %v216 = vmax.f32 %v178, 0.0
  %v217 = vmax.f32 %v181, 0.0
  %v218 = vmax.f32 %v186, 0.0
  %v219 = vmax.f32 %v189, 0.0
  %v220 = vmax.f32 %v194, 0.0
  %v221 = vmax.f32 %v197, 0.0
  %v222 = vmax.f32 %v202, 0.0
  %v223 = vmax.f32 %v205, 0.0
  %vm224 = vcmask 261120
  %225 = vst.msk [vmem:[%s3] sm:$0xff] %vm224, %v208
  %226 = vst.msk [vmem:[%s3 + $0x8] sm:$0xff] %vm224, %v209
  %227 = vst.msk [vmem:[%s3 + $0x10] sm:$0xff] %vm224, %v210
  %228 = vst.msk [vmem:[%s3 + $0x18] sm:$0xff] %vm224, %v211
  %229 = vst.msk [vmem:[%s3 + $0x20] sm:$0xff] %vm224, %v212
  %230 = vst.msk [vmem:[%s3 + $0x28] sm:$0xff] %vm224, %v213
  %231 = vst.msk [vmem:[%s3 + $0x30] sm:$0xff] %vm224, %v214
  %232 = vst.msk [vmem:[%s3 + $0x38] sm:$0xff] %vm224, %v215
  %233 = vst.msk [vmem:[%s3 + $0x40] sm:$0xff] %vm224, %v216
  %234 = vst.msk [vmem:[%s3 + $0x48] sm:$0xff] %vm224, %v217
  %235 = vst.msk [vmem:[%s3 + $0x50] sm:$0xff] %vm224, %v218
  %236 = vst.msk [vmem:[%s3 + $0x58] sm:$0xff] %vm224, %v219
  %237 = vst.msk [vmem:[%s3 + $0x60] sm:$0xff] %vm224, %v220
  %238 = vst.msk [vmem:[%s3 + $0x68] sm:$0xff] %vm224, %v221
  %239 = vst.msk [vmem:[%s3 + $0x70] sm:$0xff] %vm224, %v222
  %240 = vst.msk [vmem:[%s3 + $0x78] sm:$0xff] %vm224, %v223
  // Predicated region
  $region14: #{tpu_custom_call.1} parent=0 // pred_check
    _
  $region15: #{tpu_custom_call.1} parent=0 // pred_check_branch
    %242 = sbr.rel (0) target = $region17
  $region16: #{tpu_custom_call.1} parent=0 // pred_region
    _
  $region17: #{tpu_custom_call.1} parent=0 // pred_fallthru
    _
  // Predicated region
  $region18: #{tpu_custom_call.1} parent=0 // pred_check
    _
  $region19: #{tpu_custom_call.1} parent=0 // pred_check_branch
    %244 = sbr.rel (0) target = $region21
  $region20: #{tpu_custom_call.1} parent=0 // pred_region
    _
  $region21: #{tpu_custom_call.1} parent=0 // pred_fallthru
    _

</llo_original>
